<compile_context>
chip_gen: v7x
topology: tpu7x:2x2x1
jax: 0.10.0
libtpu: 0.0.40
codegen_flags: <defaults>
</compile_context>

<pallas_src>
import functools
import math

import jax
import jax.numpy as jnp
from jax import lax
from jax.experimental import pallas as pl
from jax.experimental.pallas import tpu as pltpu

DP = 128  # lane-padded feature dim (d_model 96 -> 128)


def _round_up(x, m):
    return ((x + m - 1) // m) * m


def _self_atten_kernel(x_ref, wqkv_ref, bqkv_ref, wo_ref, bo_ref, o_ref,
                       qkv_scr, *, tq, l_real, scale):
    # x_ref    : (TB, Lp, DP)   bf16  full (padded) sequence for TB batch rows
    # wqkv_ref : (DP, 3*DP)     bf16  fused [Wq | Wk | Wv]
    # bqkv_ref : (1, 3*DP)      f32   fused [bq | bk | bv]
    # wo_ref   : (DP, DP)       bf16
    # bo_ref   : (1, DP)        f32
    # o_ref    : (TB, TQ, DP)   x dtype (lane-dense store)
    # qkv_scr  : VMEM (TB, Lp, 3*DP) bf16 — Q/K/V cache reused across q tiles
    tb, lp, dp = x_ref.shape
    qi = pl.program_id(1)

    # ---- fused Q/K/V projection: one big MXU matmul per batch block, done
    # only on the first query tile (scratch persists; q axis is "arbitrary").
    @pl.when(qi == 0)
    def _():
        x_flat = x_ref[...].reshape(tb * lp, dp)                       # bf16
        qkv = jnp.dot(x_flat, wqkv_ref[...],
                      preferred_element_type=jnp.float32)              # (tb*lp, 3dp) f32
        qkv = qkv + bqkv_ref[...]
        qkv_scr[...] = qkv.astype(qkv_scr.dtype).reshape(tb, lp, 3 * dp)

    # ---- current query tile (128-lane-aligned column slices of the cache)
    if tq == lp:  # single-tile (short sequence) path
        q = qkv_scr[:, :, 0:dp]                                        # (tb, tq, dp)
    else:
        q_start = pl.multiple_of(qi * tq, tq)
        q = qkv_scr[:, pl.ds(q_start, tq), 0:dp]                       # (tb, tq, dp)
    k = qkv_scr[:, :, dp:2 * dp]                                       # (tb, lp, dp)
    v = qkv_scr[:, :, 2 * dp:3 * dp]                                   # (tb, lp, dp)

    # ---- scores + numerically-stable softmax (f32 on VPU/EUP)
    s = jnp.einsum("bqd,bkd->bqk", q, k,
                   preferred_element_type=jnp.float32) * scale         # (tb, tq, lp)
    if l_real < lp:  # mask zero-padded key rows (static condition)
        key_idx = lax.broadcasted_iota(jnp.int32, s.shape, 2)
        s = jnp.where(key_idx < l_real, s, -1e30)
    m = jnp.max(s, axis=-1, keepdims=True)
    p = jnp.exp(s - m)
    denom = jnp.sum(p, axis=-1, keepdims=True)
    p = p * pl.reciprocal(denom, approx=True)                          # EUP, not VPU divide

    # ---- att @ V and output projection; lane-dense (.., 128) store
    o = jnp.einsum("bqk,bkd->bqd", p.astype(v.dtype), v,
                   preferred_element_type=jnp.float32)                 # (tb, tq, dp) f32
    out = jnp.dot(o.reshape(tb * tq, dp).astype(wo_ref.dtype), wo_ref[...],
                  preferred_element_type=jnp.float32) + bo_ref[...]
    o_ref[...] = out.reshape(tb, tq, dp).astype(o_ref.dtype)


def self_atten(x, wq, wk, wv, wo, bq, bk, bv, bo):
    """Single-head scaled dot-product self-attention (h=1, dropout = identity).

    x: (B, L, D) f32; weights: (D, D); biases: (1, D). Returns (B, L, D).
    """
    B, L, D = x.shape
    scale = 1.0 / math.sqrt(D)          # d_k == d_model == 96 in the module

    # --- tiling policy ------------------------------------------------------
    if L <= 256:
        # Short sequences (typical LSTF): one query tile; pack several batch
        # elements per grid step to amortize per-step overhead / fill MXU rows.
        l_pad = _round_up(L, 16)        # bf16 sublane-tile friendly
        tq = l_pad
        tb = 1
        for cand in range(min(B, 8), 0, -1):
            if B % cand == 0:
                tb = cand
                break
    else:
        # Long sequences: 256-row query tiles keep the scores block bounded;
        # Q/K/V are projected once per batch element and cached in scratch.
        tq = 256
        l_pad = _round_up(L, tq)
        tb = 1
    n_q = l_pad // tq
    n_b = B // tb

    # --- lane-pad (96 -> 128), fuse QKV, cast MXU operands to bf16 ----------
    dpad = DP - D

    def pad_w(w):
        return jnp.pad(w, ((0, dpad), (0, dpad))).astype(jnp.bfloat16)

    def pad_b(b):
        return jnp.pad(b, ((0, 0), (0, dpad))).astype(jnp.float32)

    wqkv = jnp.concatenate([pad_w(wq), pad_w(wk), pad_w(wv)], axis=1)   # (128, 384)
    bqkv = jnp.concatenate([pad_b(bq), pad_b(bk), pad_b(bv)], axis=1)   # (1, 384)
    wo_p = pad_w(wo)                                                    # (128, 128)
    bo_p = pad_b(bo)                                                    # (1, 128)
    x_p = jnp.pad(x, ((0, 0), (0, l_pad - L), (0, dpad))).astype(jnp.bfloat16)

    kernel = functools.partial(_self_atten_kernel, tq=tq, l_real=L, scale=scale)
    const = lambda bi, qi: (0, 0)

    out_padded = pl.pallas_call(
        kernel,
        out_shape=jax.ShapeDtypeStruct((B, l_pad, DP), x.dtype),
        grid_spec=pltpu.PrefetchScalarGridSpec(
            num_scalar_prefetch=0,
            grid=(n_b, n_q),
            in_specs=[
                # Full (padded) sequence for this batch block: constant block
                # index over the query axis -> DMA'd once per batch block.
                pl.BlockSpec((tb, l_pad, DP), lambda bi, qi: (bi, 0, 0)),
                pl.BlockSpec((DP, 3 * DP), const),
                pl.BlockSpec((1, 3 * DP), const),
                pl.BlockSpec((DP, DP), const),
                pl.BlockSpec((1, DP), const),
            ],
            out_specs=pl.BlockSpec((tb, tq, DP), lambda bi, qi: (bi, qi, 0)),
            scratch_shapes=[pltpu.VMEM((tb, l_pad, 3 * DP), jnp.bfloat16)],
        ),
        compiler_params=pltpu.CompilerParams(
            # Batch blocks shard across TensorCores (megacore); the query axis
            # carries the cached Q/K/V scratch so it must stay "arbitrary".
            dimension_semantics=("parallel", "arbitrary"),
        ),
    )(x_p, wqkv, bqkv, wo_p, bo_p)

    # Drop sequence / lane padding (padded output columns are exactly zero).
    return out_padded[:, :L, :D]


def _reference_self_atten(x, wq, wk, wv, wo, bq, bk, bv, bo):
    # Pure-JAX f32 reference mirroring ScaledDotProductAttention (h=1, no dropout).
    d_k = x.shape[-1]
    q = x @ wq + bq
    k = x @ wk + bk
    v = x @ wv + bv
    s = jnp.einsum("bqd,bkd->bqk", q, k) / jnp.sqrt(jnp.float32(d_k))
    p = jax.nn.softmax(s, axis=-1)
    o = jnp.einsum("bqk,bkd->bqd", p, v)
    return o @ wo + bo


if __name__ == "__main__":
    d_model = 96            # fixed by the module (d_model=d_k=d_v=96, h=1)
    B, L = 2, 16

    key = jax.random.PRNGKey(0)
    kx, kq, kk, kv, ko, kbq, kbk, kbv, kbo = jax.random.split(key, 9)
    init = 1.0 / math.sqrt(d_model)
    x = jax.random.normal(kx, (B, L, d_model), dtype=jnp.float32)
    wq = jax.random.normal(kq, (d_model, d_model), jnp.float32) * init
    wk = jax.random.normal(kk, (d_model, d_model), jnp.float32) * init
    wv = jax.random.normal(kv, (d_model, d_model), jnp.float32) * init
    wo = jax.random.normal(ko, (d_model, d_model), jnp.float32) * init
    bq = jax.random.normal(kbq, (1, d_model), jnp.float32) * 0.02
    bk = jax.random.normal(kbk, (1, d_model), jnp.float32) * 0.02
    bv = jax.random.normal(kbv, (1, d_model), jnp.float32) * 0.02
    bo = jax.random.normal(kbo, (1, d_model), jnp.float32) * 0.02

    out = self_atten(x, wq, wk, wv, wo, bq, bk, bv, bo)
    out = jax.block_until_ready(out)

    ref = _reference_self_atten(x, wq, wk, wv, wo, bq, bk, bv, bo)
    assert out.shape == ref.shape, (out.shape, ref.shape)
    # Tolerance absorbs bf16 MXU operand rounding (+ approx reciprocal);
    # structural errors produce O(1) deviations and still fail.
    assert jnp.allclose(out, ref, atol=5e-2, rtol=5e-2), "mismatch vs reference"

    print("KERNEL_OK")
</pallas_src>

<mosaic_0001>
module attributes {stable_mosaic.version = 11 : i64} {
  func.func @_self_atten_kernel(%arg0: i32, %arg1: i32, %arg2: memref<2x16x128xbf16, #tpu.memory_space<vmem>>, %arg3: memref<128x384xbf16, #tpu.memory_space<vmem>>, %arg4: memref<1x384xf32, #tpu.memory_space<vmem>>, %arg5: memref<128x128xbf16, #tpu.memory_space<vmem>>, %arg6: memref<1x128xf32, #tpu.memory_space<vmem>>, %arg7: memref<2x16x128xf32, #tpu.memory_space<vmem>>, %arg8: memref<2x16x384xbf16, #tpu.memory_space<vmem>>) attributes {dimension_semantics = [#tpu.dimension_semantics<parallel>, #tpu.dimension_semantics<arbitrary>], iteration_bounds = array<i64: 1, 1>, scalar_prefetch = 0 : i64, scratch_operands = 1 : i64, tpu.core_type = #tpu.core_type<tc>, window_params = [{transform_indices = @transform_0, window_bounds = array<i64: 2, 16, 128>}, {pipeline_mode = #tpu.pipeline_mode<synchronous>, transform_indices = @transform_1, window_bounds = array<i64: 128, 384>}, {pipeline_mode = #tpu.pipeline_mode<synchronous>, transform_indices = @transform_2, window_bounds = array<i64: 1, 384>}, {pipeline_mode = #tpu.pipeline_mode<synchronous>, transform_indices = @transform_3, window_bounds = array<i64: 128, 128>}, {pipeline_mode = #tpu.pipeline_mode<synchronous>, transform_indices = @transform_4, window_bounds = array<i64: 1, 128>}, {transform_indices = @transform_5, window_bounds = array<i64: 2, 16, 128>}]} {
    %c0_i32 = arith.constant 0 : i32
    %0 = arith.cmpi eq, %arg1, %c0_i32 : i32
    %1 = arith.extui %0 : i1 to i32
    %c0_i32_0 = arith.constant 0 : i32
    %2 = arith.cmpi ne, %1, %c0_i32_0 : i32
    scf.if %2 {
      %c0_19 = arith.constant 0 : index
      %c0_20 = arith.constant 0 : index
      %c0_21 = arith.constant 0 : index
      %30 = vector.load %arg2[%c0_19, %c0_20, %c0_21] : memref<2x16x128xbf16, #tpu.memory_space<vmem>>, vector<2x16x128xbf16>
      %31 = vector.shape_cast %30 : vector<2x16x128xbf16> to vector<32x128xbf16>
      %c0_22 = arith.constant 0 : index
      %c0_23 = arith.constant 0 : index
      %32 = vector.load %arg3[%c0_22, %c0_23] : memref<128x384xbf16, #tpu.memory_space<vmem>>, vector<128x384xbf16>
      %cst_24 = arith.constant dense<0.000000e+00> : vector<32x384xf32>
      %33 = tpu.matmul %31, %32, %cst_24 {dimension_numbers = #tpu.dot_dimension_numbers<[1], [0], [0], [1], [0, 0, 1, 1], [], []>} : vector<32x128xbf16>, vector<128x384xbf16>, vector<32x384xf32> -> vector<32x384xf32>
      %c0_25 = arith.constant 0 : index
      %c0_26 = arith.constant 0 : index
      %34 = vector.load %arg4[%c0_25, %c0_26] : memref<1x384xf32, #tpu.memory_space<vmem>>, vector<1x384xf32>
      %35 = vector.broadcast %34 : vector<1x384xf32> to vector<32x384xf32>
      %36 = arith.addf %33, %35 : vector<32x384xf32>
      %37 = arith.truncf %36 : vector<32x384xf32> to vector<32x384xbf16>
      %38 = vector.shape_cast %37 : vector<32x384xbf16> to vector<2x16x384xbf16>
      %c0_27 = arith.constant 0 : index
      %c0_28 = arith.constant 0 : index
      %c0_29 = arith.constant 0 : index
      %39 = vector.load %arg8[%c0_27, %c0_28, %c0_29] : memref<2x16x384xbf16, #tpu.memory_space<vmem>>, vector<2x16x384xbf16>
      tpu.vector_store %arg8[%c0_27, %c0_28, %c0_29], %38 {strides = array<i32>} : memref<2x16x384xbf16, #tpu.memory_space<vmem>>, vector<2x16x384xbf16>,
    } else {
    }
    %c0 = arith.constant 0 : index
    %c0_1 = arith.constant 0 : index
    %c0_2 = arith.constant 0 : index
    %3 = vector.load %arg8[%c0, %c0_1, %c0_2] : memref<2x16x384xbf16, #tpu.memory_space<vmem>>, vector<2x16x128xbf16>
    %c0_3 = arith.constant 0 : index
    %c0_4 = arith.constant 0 : index
    %c128 = arith.constant 128 : index
    %4 = vector.load %arg8[%c0_3, %c0_4, %c128] : memref<2x16x384xbf16, #tpu.memory_space<vmem>>, vector<2x16x128xbf16>
    %c0_5 = arith.constant 0 : index
    %c0_6 = arith.constant 0 : index
    %c256 = arith.constant 256 : index
    %5 = vector.load %arg8[%c0_5, %c0_6, %c256] : memref<2x16x384xbf16, #tpu.memory_space<vmem>>, vector<2x16x128xbf16>
    "tpu.trace_start"() <{level = 10 : i32, message = "bqd,bkd->bqk"}> : () -> ()
    %cst = arith.constant dense<0.000000e+00> : vector<2x16x16xf32>
    %6 = tpu.matmul %3, %4, %cst {dimension_numbers = #tpu.dot_dimension_numbers<[2], [2], [1], [1], [0, 0, 0, 1, 1, 1], [0], [0]>} : vector<2x16x128xbf16>, vector<2x16x128xbf16>, vector<2x16x16xf32> -> vector<2x16x16xf32>
    "tpu.trace_stop"() : () -> ()
    %cst_7 = arith.constant 0.102062076 : f32
    %7 = vector.broadcast %cst_7 : f32 to vector<2x16x16xf32>
    %8 = arith.mulf %6, %7 : vector<2x16x16xf32>
    %cst_8 = arith.constant dense<0xFF800000> : vector<2x16xf32>
    %9 = vector.multi_reduction <maximumf>, %8, %cst_8 [2] : vector<2x16x16xf32> to vector<2x16xf32>
    %10 = vector.shape_cast %9 : vector<2x16xf32> to vector<2x16x1xf32>
    %11 = vector.broadcast %10 : vector<2x16x1xf32> to vector<2x16x16xf32>
    %12 = arith.subf %8, %11 : vector<2x16x16xf32>
    %13 = math.exp %12 : vector<2x16x16xf32>
    %cst_9 = arith.constant dense<0.000000e+00> : vector<2x16xf32>
    %14 = vector.multi_reduction <add>, %13, %cst_9 [2] : vector<2x16x16xf32> to vector<2x16xf32>
    %15 = vector.shape_cast %14 : vector<2x16xf32> to vector<2x16x1xf32>
    %16 = tpu.reciprocal %15 {approx = true} : vector<2x16x1xf32> -> vector<2x16x1xf32>
    %17 = vector.broadcast %16 : vector<2x16x1xf32> to vector<2x16x16xf32>
    %18 = arith.mulf %13, %17 : vector<2x16x16xf32>
    %19 = arith.truncf %18 : vector<2x16x16xf32> to vector<2x16x16xbf16>
    "tpu.trace_start"() <{level = 10 : i32, message = "bqk,bkd->bqd"}> : () -> ()
    %cst_10 = arith.constant dense<0.000000e+00> : vector<2x16x128xf32>
    %20 = tpu.matmul %19, %5, %cst_10 {dimension_numbers = #tpu.dot_dimension_numbers<[2], [1], [1], [2], [0, 0, 0, 1, 1, 2], [0], [0]>} : vector<2x16x16xbf16>, vector<2x16x128xbf16>, vector<2x16x128xf32> -> vector<2x16x128xf32>
    "tpu.trace_stop"() : () -> ()
    %21 = vector.shape_cast %20 : vector<2x16x128xf32> to vector<32x128xf32>
    %22 = arith.truncf %21 : vector<32x128xf32> to vector<32x128xbf16>
    %c0_11 = arith.constant 0 : index
    %c0_12 = arith.constant 0 : index
    %23 = vector.load %arg5[%c0_11, %c0_12] : memref<128x128xbf16, #tpu.memory_space<vmem>>, vector<128x128xbf16>
    %cst_13 = arith.constant dense<0.000000e+00> : vector<32x128xf32>
    %24 = tpu.matmul %22, %23, %cst_13 {dimension_numbers = #tpu.dot_dimension_numbers<[1], [0], [0], [1], [0, 0, 1, 1], [], []>} : vector<32x128xbf16>, vector<128x128xbf16>, vector<32x128xf32> -> vector<32x128xf32>
    %c0_14 = arith.constant 0 : index
    %c0_15 = arith.constant 0 : index
    %25 = vector.load %arg6[%c0_14, %c0_15] : memref<1x128xf32, #tpu.memory_space<vmem>>, vector<1x128xf32>
    %26 = vector.broadcast %25 : vector<1x128xf32> to vector<32x128xf32>
    %27 = arith.addf %24, %26 : vector<32x128xf32>
    %28 = vector.shape_cast %27 : vector<32x128xf32> to vector<2x16x128xf32>
    %c0_16 = arith.constant 0 : index
    %c0_17 = arith.constant 0 : index
    %c0_18 = arith.constant 0 : index
    %29 = vector.load %arg7[%c0_16, %c0_17, %c0_18] : memref<2x16x128xf32, #tpu.memory_space<vmem>>, vector<2x16x128xf32>
    tpu.vector_store %arg7[%c0_16, %c0_17, %c0_18], %28 {strides = array<i32>} : memref<2x16x128xf32, #tpu.memory_space<vmem>>, vector<2x16x128xf32>,
    return
  }
  func.func @transform_0(%arg0: i32, %arg1: i32) -> (i32, i32, i32) {
    %c0_i32 = arith.constant 0 : i32
    %c0_i32_0 = arith.constant 0 : i32
    %c0_i32_1 = arith.constant 0 : i32
    return %arg0, %c0_i32, %c0_i32_0 : i32, i32, i32
  }
  func.func @transform_1(%arg0: i32, %arg1: i32) -> (i32, i32) {
    %c0_i32 = arith.constant 0 : i32
    %c0_i32_0 = arith.constant 0 : i32
    %c0_i32_1 = arith.constant 0 : i32
    return %c0_i32, %c0_i32_0 : i32, i32
  }
  func.func @transform_2(%arg0: i32, %arg1: i32) -> (i32, i32) {
    %c0_i32 = arith.constant 0 : i32
    %c0_i32_0 = arith.constant 0 : i32
    %c0_i32_1 = arith.constant 0 : i32
    return %c0_i32, %c0_i32_0 : i32, i32
  }
  func.func @transform_3(%arg0: i32, %arg1: i32) -> (i32, i32) {
    %c0_i32 = arith.constant 0 : i32
    %c0_i32_0 = arith.constant 0 : i32
    %c0_i32_1 = arith.constant 0 : i32
    return %c0_i32, %c0_i32_0 : i32, i32
  }
  func.func @transform_4(%arg0: i32, %arg1: i32) -> (i32, i32) {
    %c0_i32 = arith.constant 0 : i32
    %c0_i32_0 = arith.constant 0 : i32
    %c0_i32_1 = arith.constant 0 : i32
    return %c0_i32, %c0_i32_0 : i32, i32
  }
  func.func @transform_5(%arg0: i32, %arg1: i32) -> (i32, i32, i32) {
    %c0_i32 = arith.constant 0 : i32
    %c0_i32_0 = arith.constant 0 : i32
    return %arg0, %arg1, %c0_i32 : i32, i32, i32
  }
}

</mosaic_0001>

<llo_original>
// kernel: tpu_custom_call.1
$region0: #{tpu_custom_call.1}
  #allocation0 [shape = 'u32[]', space=smem, size = 0x4, offset = 0x4, fixed_abs, tag = 'smem constant byte address 0x4 - core index']
  #allocation1 [shape = 'u32[144,128]{1,0:T(1,128)}', space=vmem, size = 0x12000, scoped, tag = 'internal scratch']
  #allocation2 [shape = 'bf16[2,16,384]{2,1,0:T(16,128)(2,1)}', space=vmem, size = 0x6000, scoped, tag = 'scratch operand']
  %s0 = inlined_call_operand.hbm [shape: bf16[2,16,128], index: 0, kind: input, shape index: {}]
  %s1 = inlined_call_operand.hbm [shape: bf16[128,384], index: 1, kind: input, shape index: {}]
  %s2 = inlined_call_operand.vmem [shape: f32[1,384], index: 2, kind: input, shape index: {}]
  %s3 = inlined_call_operand.hbm [shape: bf16[128,128], index: 3, kind: input, shape index: {}]
  %s4 = inlined_call_operand.vmem [shape: f32[1,128], index: 4, kind: input, shape index: {}]
  %s5 = inlined_call_operand.hbm [shape: f32[2,16,128], index: 5, kind: output, shape index: {}]
  %s6 = sld [smem:[#allocation0]]
  $region46: #{tpu_custom_call.1} parent=0
    _
  %s8 = ssub.s32 1, %s6
  %s9 = scalar_select 0, %s8, %s6
  $region1: #{tpu_custom_call.1} parent=0
    #allocation3 [shape = 'u8[8192]{0}', space=vmem, size = 0x2000, scoped, tag = 'input window, operand 0, single buffered']
    #allocation4 [shape = 's32[1]{0}', space=sflag, size = 0x4, scoped, tag = 'scoped memory for tpu_custom_call.1']
    #allocation5 [shape = 's32[1]{0}', space=sflag, size = 0x4, scoped, tag = 'scoped memory for tpu_custom_call.1']
    #allocation6 [shape = 'u8[98304]{0}', space=vmem, size = 0x18000, scoped, tag = 'input window, operand 1, single buffered']
    #allocation7 [shape = 's32[1]{0}', space=sflag, size = 0x4, scoped, tag = 'scoped memory for tpu_custom_call.1']
    #allocation8 [shape = 'u8[32768]{0}', space=vmem, size = 0x8000, scoped, tag = 'input window, operand 3, single buffered']
    #allocation9 [shape = 'u8[16384]{0}', space=vmem, size = 0x4000, scoped, tag = 'output window, operand 0, single buffered']
    %10 = vsyncpa [#allocation4], 0
    %11 = vsyncpa [#allocation7], 0
    %12 = vsyncpa [#allocation5], 0
    // Predicated region
    $region2: #{tpu_custom_call.1} parent=1 // pred_check
      _
    $region3: #{tpu_custom_call.1} parent=1 // pred_check_branch
      %14 = sbr.rel (0) target = $region5
    $region4: #{tpu_custom_call.1} parent=1 // pred_region
      %s16 = ssub.s32 256, 256
      %17 = vsyncadd [#allocation4], %s16
      %s18 = sshll.u32 [#allocation3], 4
      %s19 = int_to_ptr.vmem [resolvable:$true] %s18
      %24 = dma.hbm_to_vmem [thread:$0]  %s0, 256, %s19, [#allocation4], 64, 64, 4
    $region5: #{tpu_custom_call.1} parent=1 // pred_fallthru
      _
    // Predicated region
    $region6: #{tpu_custom_call.1} parent=1 // pred_check
      _
    $region7: #{tpu_custom_call.1} parent=1 // pred_check_branch
      %26 = sbr.rel (0) target = $region9
    $region8: #{tpu_custom_call.1} parent=1 // pred_region
      %s28 = ssub.s32 3072, 3072
      %29 = vsyncadd [#allocation7], %s28
      %s30 = sshll.u32 [#allocation6], 4
      %s31 = int_to_ptr.vmem [resolvable:$true] %s30
      %36 = dma.hbm_to_vmem [thread:$0]  %s1, 3072, %s31, [#allocation7], 192, 192, 12
    $region9: #{tpu_custom_call.1} parent=1 // pred_fallthru
      _
    // Predicated region
    $region10: #{tpu_custom_call.1} parent=1 // pred_check
      _
    $region11: #{tpu_custom_call.1} parent=1 // pred_check_branch
      %38 = sbr.rel (0) target = $region13
    $region12: #{tpu_custom_call.1} parent=1 // pred_region
      _
    $region13: #{tpu_custom_call.1} parent=1 // pred_fallthru
      _
    // Predicated region
    $region14: #{tpu_custom_call.1} parent=1 // pred_check
      _
    $region15: #{tpu_custom_call.1} parent=1 // pred_check_branch
      %40 = sbr.rel (0) target = $region17
    $region16: #{tpu_custom_call.1} parent=1 // pred_region
      %s42 = ssub.s32 1024, 1024
      %43 = vsyncadd [#allocation7], %s42
      %s44 = sshll.u32 [#allocation8], 4
      %s45 = int_to_ptr.vmem [resolvable:$true] %s44
      %50 = dma.hbm_to_vmem [thread:$0]  %s3, 1024, %s45, [#allocation7], 64, 64, 4
    $region17: #{tpu_custom_call.1} parent=1 // pred_fallthru
      _
    // Predicated region
    $region18: #{tpu_custom_call.1} parent=1 // pred_check
      _
    $region19: #{tpu_custom_call.1} parent=1 // pred_check_branch
      %52 = sbr.rel (0) target = $region21
    $region20: #{tpu_custom_call.1} parent=1 // pred_region
      _
    $region21: #{tpu_custom_call.1} parent=1 // pred_fallthru
      _
    // Predicated region
    $region22: #{tpu_custom_call.1} parent=1 // pred_check
      _
    $region23: #{tpu_custom_call.1} parent=1 // pred_check_branch
      %54 = sbr.rel (0) target = $region25
    $region24: #{tpu_custom_call.1} parent=1 // pred_region
      %55 = dma.done [#allocation4], 256
    $region25: #{tpu_custom_call.1} parent=1 // pred_fallthru
      _
    // Predicated region
    $region26: #{tpu_custom_call.1} parent=1 // pred_check
      _
    $region27: #{tpu_custom_call.1} parent=1 // pred_check_branch
      %57 = sbr.rel (0) target = $region29
    $region28: #{tpu_custom_call.1} parent=1 // pred_region
      %58 = dma.done [#allocation7], 3072
    $region29: #{tpu_custom_call.1} parent=1 // pred_fallthru
      _
    // Predicated region
    $region30: #{tpu_custom_call.1} parent=1 // pred_check
      _
    $region31: #{tpu_custom_call.1} parent=1 // pred_check_branch
      %60 = sbr.rel (0) target = $region33
    $region32: #{tpu_custom_call.1} parent=1 // pred_region
      %61 = dma.done [#allocation7], 1024
    $region33: #{tpu_custom_call.1} parent=1 // pred_fallthru
      _
    %p63 = scmp.eq.s32.totalorder 0, 0
    // Predicated region
    $region34: #{tpu_custom_call.1} parent=1 // pred_check
      %p64 = pneg %p63
    $region35: #{tpu_custom_call.1} parent=1 // pred_check_branch
      %66 = sbr.rel (%p64) target = $region37
    $region36: #{tpu_custom_call.1} parent=1 // pred_region
      %v67 = vld [vmem:[#allocation3] sm:$0xf]
      %v68 = vld [vmem:[#allocation3 + $0x4] sm:$0xf]
      %v69 = vld [vmem:[#allocation3 + $0x8] sm:$0xf]
      %v70 = vld [vmem:[#allocation3 + $0xc] sm:$0xf]
      %v71 = vld [vmem:[#allocation6] sm:$0xff]
      %v72 = vld [vmem:[#allocation6 + $0x8] sm:$0xf]
      %v73 = vld [vmem:[#allocation6 + $0xc] sm:$0xff]
      %v74 = vld [vmem:[#allocation6 + $0x14] sm:$0xf]
      %v75 = vld [vmem:[#allocation6 + $0x18] sm:$0xff]
      %v76 = vld [vmem:[#allocation6 + $0x20] sm:$0xf]
      %v77 = vld [vmem:[#allocation6 + $0x24] sm:$0xff]
      %v78 = vld [vmem:[#allocation6 + $0x2c] sm:$0xf]
      %v79 = vld [vmem:[#allocation6 + $0x30] sm:$0xff]
      %v80 = vld [vmem:[#allocation6 + $0x38] sm:$0xf]
      %v81 = vld [vmem:[#allocation6 + $0x3c] sm:$0xff]
      %v82 = vld [vmem:[#allocation6 + $0x44] sm:$0xf]
      %v83 = vld [vmem:[#allocation6 + $0x48] sm:$0xff]
      %v84 = vld [vmem:[#allocation6 + $0x50] sm:$0xf]
      %v85 = vld [vmem:[#allocation6 + $0x54] sm:$0xff]
      %v86 = vld [vmem:[#allocation6 + $0x5c] sm:$0xf]
      %v87 = vld [vmem:[#allocation6 + $0x60] sm:$0xff]
      %v88 = vld [vmem:[#allocation6 + $0x68] sm:$0xf]
      %v89 = vld [vmem:[#allocation6 + $0x6c] sm:$0xff]
      %v90 = vld [vmem:[#allocation6 + $0x74] sm:$0xf]
      %v91 = vld [vmem:[#allocation6 + $0x78] sm:$0xff]
      %v92 = vld [vmem:[#allocation6 + $0x80] sm:$0xf]
      %v93 = vld [vmem:[#allocation6 + $0x84] sm:$0xff]
      %v94 = vld [vmem:[#allocation6 + $0x8c] sm:$0xf]
      %v95 = vld [vmem:[#allocation6 + $0x90] sm:$0xff]
      %v96 = vld [vmem:[#allocation6 + $0x98] sm:$0xf]
      %v97 = vld [vmem:[#allocation6 + $0x9c] sm:$0xff]
      %v98 = vld [vmem:[#allocation6 + $0xa4] sm:$0xf]
      %v99 = vld [vmem:[#allocation6 + $0xa8] sm:$0xff]
      %v100 = vld [vmem:[#allocation6 + $0xb0] sm:$0xf]
      %v101 = vld [vmem:[#allocation6 + $0xb4] sm:$0xff]
      %v102 = vld [vmem:[#allocation6 + $0xbc] sm:$0xf]
      %v103 = vld [vmem:[%s2] sm:$0x7]
      %v105 = vlaneseq
      %v106 = vshrl.u32 %v105, 7
      %v107 = vsub.s32 0, %v106
      %v108 = vrot.slane %v103, %v107
      %v109 = vlaneseq
      %v110 = vshrl.u32 %v109, 7
      %v111 = vsub.s32 1, %v110
      %v112 = vrot.slane %v103, %v111
      %v113 = vlaneseq
      %v114 = vshrl.u32 %v113, 7
      %v115 = vsub.s32 2, %v114
      %v116 = vrot.slane %v103, %v115
      %v124 = vunpack.c.l.b16 %v67
      %v125 = vunpack.c.l.b16 %v68
      %v126 = vunpack.c.l.b16 %v69
      %v127 = vunpack.c.l.b16 %v70
      %v128 = vpack.c.b16 %v125, %v124
      %v129 = vpack.c.b16 %v127, %v126
      %v164 = vunpack.c.l.b16 %v71
      %v165 = vunpack.c.h.b16 %v71
      %v166 = vunpack.c.l.b16 %v72
      %v167 = vunpack.c.l.b16 %v73
      %v168 = vunpack.c.h.b16 %v73
      %v169 = vunpack.c.l.b16 %v74
      %v170 = vunpack.c.l.b16 %v75
      %v171 = vunpack.c.h.b16 %v75
      %v172 = vunpack.c.l.b16 %v76
      %v173 = vunpack.c.l.b16 %v77
      %v174 = vunpack.c.h.b16 %v77
      %v175 = vunpack.c.l.b16 %v78
      %v176 = vunpack.c.l.b16 %v79
      %v177 = vunpack.c.h.b16 %v79
      %v178 = vunpack.c.l.b16 %v80
      %v179 = vunpack.c.l.b16 %v81
      %v180 = vunpack.c.h.b16 %v81
      %v181 = vunpack.c.l.b16 %v82
      %v182 = vunpack.c.l.b16 %v83
      %v183 = vunpack.c.h.b16 %v83
      %v184 = vunpack.c.l.b16 %v84
      %v185 = vunpack.c.l.b16 %v85
      %v186 = vunpack.c.h.b16 %v85
      %v187 = vunpack.c.l.b16 %v86
      %v188 = vunpack.c.l.b16 %v87
      %v189 = vunpack.c.h.b16 %v87
      %v190 = vunpack.c.l.b16 %v88
      %v191 = vunpack.c.l.b16 %v89
      %v192 = vunpack.c.h.b16 %v89
      %v193 = vunpack.c.l.b16 %v90
      %v194 = vunpack.c.l.b16 %v91
      %v195 = vunpack.c.h.b16 %v91
      %v196 = vunpack.c.l.b16 %v92
      %v197 = vunpack.c.l.b16 %v93
      %v198 = vunpack.c.h.b16 %v93
      %v199 = vunpack.c.l.b16 %v94
      %v200 = vunpack.c.l.b16 %v95
      %v201 = vunpack.c.h.b16 %v95
      %v202 = vunpack.c.l.b16 %v96
      %v203 = vunpack.c.l.b16 %v97
      %v204 = vunpack.c.h.b16 %v97
      %v205 = vunpack.c.l.b16 %v98
      %v206 = vunpack.c.l.b16 %v99
      %v207 = vunpack.c.h.b16 %v99
      %v208 = vunpack.c.l.b16 %v100
      %v209 = vunpack.c.l.b16 %v101
      %v210 = vunpack.c.h.b16 %v101
      %v211 = vunpack.c.l.b16 %v102
      %v212 = vpack.c.b16 %v167, %v164
      %v213 = vpack.c.b16 %v168, %v165
      %v214 = vpack.c.b16 %v169, %v166
      %v215 = vpack.c.b16 %v173, %v170
      %v216 = vpack.c.b16 %v174, %v171
      %v217 = vpack.c.b16 %v175, %v172
      %v218 = vpack.c.b16 %v179, %v176
      %v219 = vpack.c.b16 %v180, %v177
      %v220 = vpack.c.b16 %v181, %v178
      %v221 = vpack.c.b16 %v185, %v182
      %v222 = vpack.c.b16 %v186, %v183
      %v223 = vpack.c.b16 %v187, %v184
      %v224 = vpack.c.b16 %v191, %v188
      %v225 = vpack.c.b16 %v192, %v189
      %v226 = vpack.c.b16 %v193, %v190
      %v227 = vpack.c.b16 %v197, %v194
      %v228 = vpack.c.b16 %v198, %v195
      %v229 = vpack.c.b16 %v199, %v196
      %v230 = vpack.c.b16 %v203, %v200
      %v231 = vpack.c.b16 %v204, %v201
      %v232 = vpack.c.b16 %v205, %v202
      %v233 = vpack.c.b16 %v209, %v206
      %v234 = vpack.c.b16 %v210, %v207
      %v235 = vpack.c.b16 %v211, %v208
      %260 = vmatprep.subr.bf16.mxu0 %v213
      %261 = vmatpush1.bf16.msra.mxu0 %v212
      %262 = vmatprep.subr.bf16.mxu0 %v216
      %263 = vmatpush1.bf16.msra.mxu0 %v215
      %264 = vmatprep.subr.bf16.mxu0 %v219
      %265 = vmatpush1.bf16.msra.mxu0 %v218
      %266 = vmatprep.subr.bf16.mxu0 %v222
      %267 = vmatpush1.bf16.msra.mxu0 %v221
      %268 = vmatprep.subr.bf16.mxu0 %v225
      %269 = vmatpush1.bf16.msra.mxu0 %v224
      %270 = vmatprep.subr.bf16.mxu0 %v228
      %271 = vmatpush1.bf16.msra.mxu0 %v227
      %272 = vmatprep.subr.bf16.mxu0 %v231
      %273 = vmatpush1.bf16.msra.mxu0 %v230
      %274 = vmatprep.subr.bf16.mxu0 %v234
      %275 = vmatpush1.bf16.msra.mxu0 %v233
      %276 = vmatprep.subr.bf16.mxu0 0
      %277 = vmatpush1.bf16.msra.mxu0 0
      %278 = vmatprep.subr.bf16.mxu0 0
      %279 = vmatpush1.bf16.msra.mxu0 0
      %280 = vmatprep.subr.bf16.mxu0 0
      %281 = vmatpush1.bf16.msra.mxu0 0
      %282 = vmatprep.subr.bf16.mxu0 0
      %283 = vmatpush1.bf16.msra.mxu0 0
      %284 = vmatprep.subr.bf16.mxu0 0
      %285 = vmatpush1.bf16.msra.mxu0 0
      %286 = vmatprep.subr.bf16.mxu0 0
      %287 = vmatpush1.bf16.msra.mxu0 0
      %288 = vmatprep.subr.bf16.mxu0 0
      %289 = vmatpush1.bf16.msra.mxu0 0
      %290 = vmatprep.subr.bf16.mxu0 0
      %291 = vmatpush1.bf16.msra.mxu0 0
      %292 = vmatprep.mubr.bf16.mxu0 0
      %293 = vmatmul.mubr.bf16.gmra.mrb[0].mxu0 %v128
      %v294 = vpop.f32.mrb[0].mxu0
      %v295 = vadd.f32 %v108, %v294
      %v296 = vpop.f32.mrb[0].mxu0
      %v297 = vadd.f32 %v112, %v296
      %v298 = vpop.f32.mrb[0].mxu0
      %v299 = vadd.f32 %v108, %v298
      %v300 = vpop.f32.mrb[0].mxu0
      %v301 = vadd.f32 %v112, %v300
      %302 = vmatprep.mubr.bf16.mxu0 0
      %303 = vmatmul.mubr.bf16.gmra.mrb[0].mxu0 %v129
      %v304 = vpop.f32.mrb[0].mxu0
      %v305 = vadd.f32 %v108, %v304
      %v306 = vpop.f32.mrb[0].mxu0
      %v307 = vadd.f32 %v112, %v306
      %v308 = vpop.f32.mrb[0].mxu0
      %v309 = vadd.f32 %v108, %v308
      %v310 = vpop.f32.mrb[0].mxu0
      %v311 = vadd.f32 %v112, %v310
      %312 = vdwg.mxu0
      %313 = vmatprep.subr.bf16.mxu0 0
      %314 = vmatpush1.bf16.msra.mxu0 %v214
      %315 = vmatprep.subr.bf16.mxu0 0
      %316 = vmatpush1.bf16.msra.mxu0 %v217
      %317 = vmatprep.subr.bf16.mxu0 0
      %318 = vmatpush1.bf16.msra.mxu0 %v220
      %319 = vmatprep.subr.bf16.mxu0 0
      %320 = vmatpush1.bf16.msra.mxu0 %v223
      %321 = vmatprep.subr.bf16.mxu0 0
      %322 = vmatpush1.bf16.msra.mxu0 %v226
      %323 = vmatprep.subr.bf16.mxu0 0
      %324 = vmatpush1.bf16.msra.mxu0 %v229
      %325 = vmatprep.subr.bf16.mxu0 0
      %326 = vmatpush1.bf16.msra.mxu0 %v232
      %327 = vmatprep.subr.bf16.mxu0 0
      %328 = vmatpush1.bf16.msra.mxu0 %v235
      %329 = vmatprep.subr.bf16.mxu0 0
      %330 = vmatpush1.bf16.msra.mxu0 0
      %331 = vmatprep.subr.bf16.mxu0 0
      %332 = vmatpush1.bf16.msra.mxu0 0
      %333 = vmatprep.subr.bf16.mxu0 0
      %334 = vmatpush1.bf16.msra.mxu0 0
      %335 = vmatprep.subr.bf16.mxu0 0
      %336 = vmatpush1.bf16.msra.mxu0 0
      %337 = vmatprep.subr.bf16.mxu0 0
      %338 = vmatpush1.bf16.msra.mxu0 0
      %339 = vmatprep.subr.bf16.mxu0 0
      %340 = vmatpush1.bf16.msra.mxu0 0
      %341 = vmatprep.subr.bf16.mxu0 0
      %342 = vmatpush1.bf16.msra.mxu0 0
      %343 = vmatprep.subr.bf16.mxu0 0
      %344 = vmatpush1.bf16.msra.mxu0 0
      %345 = vmatprep.mubr.bf16.mxu0 0
      %346 = vmatmul.mubr.bf16.gmra.mrb[0].mxu0 %v128
      %v347 = vpop.f32.mrb[0].mxu0
      %v348 = vadd.f32 %v116, %v347
      %v349 = vpop.f32.mrb[0].mxu0
      %v350 = vpop.f32.mrb[0].mxu0
      %v351 = vadd.f32 %v116, %v350
      %v352 = vpop.f32.mrb[0].mxu0
      %353 = vmatprep.mubr.bf16.mxu0 0
      %354 = vmatmul.mubr.bf16.gmra.mrb[0].mxu0 %v129
      %v355 = vpop.f32.mrb[0].mxu0
      %v356 = vadd.f32 %v116, %v355
      %v357 = vpop.f32.mrb[0].mxu0
      %v358 = vpop.f32.mrb[0].mxu0
      %v359 = vadd.f32 %v116, %v358
      %v360 = vpop.f32.mrb[0].mxu0
      %361 = vdwg.mxu0
      %v362 = vpack.c.bf16 %v299, %v295
      %v363 = vpack.c.bf16 %v301, %v297
      %v364 = vpack.c.bf16 %v351, %v348
      %v365 = vpack.c.bf16 %v309, %v305
      %v366 = vpack.c.bf16 %v311, %v307
      %v367 = vpack.c.bf16 %v359, %v356
      %368 = vst [vmem:[#allocation2] sm:$0xff] %v362
      %369 = vst [vmem:[#allocation2 + $0x8] sm:$0xff] %v363
      %370 = vst [vmem:[#allocation2 + $0x10] sm:$0xff] %v364
      %371 = vst [vmem:[#allocation2 + $0x18] sm:$0xff] %v365
      %372 = vst [vmem:[#allocation2 + $0x20] sm:$0xff] %v366
      %373 = vst [vmem:[#allocation2 + $0x28] sm:$0xff] %v367
    $region37: #{tpu_custom_call.1} parent=1 // pred_fallthru
      _
    %v374 = vld [vmem:[#allocation2] sm:$0xff]
    %v375 = vld [vmem:[#allocation2 + $0x18] sm:$0xff]
    %v376 = vld [vmem:[#allocation2 + $0x8] sm:$0xff]
    %v377 = vld [vmem:[#allocation2 + $0x20] sm:$0xff]
    %v378 = vld [vmem:[#allocation2 + $0x10] sm:$0xff]
    %v379 = vld [vmem:[#allocation2 + $0x28] sm:$0xff]
    %380 = vmatprep.subr.bf16.mxu0 0
    %381 = vmatpush1.bf16.xpose.msra.mxu0 %v376
    %382 = vmatprep.subr.bf16.mxu0 0
    %383 = vmatpush1.bf16.xpose.msra.mxu0 0
    %384 = vmatprep.subr.bf16.mxu0 0
    %385 = vmatpush1.bf16.xpose.msra.mxu0 0
    %386 = vmatprep.subr.bf16.mxu0 0
    %387 = vmatpush1.bf16.xpose.msra.mxu0 0
    %388 = vmatprep.subr.bf16.mxu0 0
    %389 = vmatpush1.bf16.xpose.msra.mxu0 0
    %390 = vmatprep.subr.bf16.mxu0 0
    %391 = vmatpush1.bf16.xpose.msra.mxu0 0
    %392 = vmatprep.subr.bf16.mxu0 0
    %393 = vmatpush1.bf16.xpose.msra.mxu0 0
    %394 = vmatprep.subr.bf16.mxu0 0
    %395 = vmatpush1.bf16.xpose.msra.mxu0 0
    %396 = vmatprep.subr.bf16.mxu0 0
    %397 = vmatpush1.bf16.xpose.msra.mxu0 0
    %398 = vmatprep.subr.bf16.mxu0 0
    %399 = vmatpush1.bf16.xpose.msra.mxu0 0
    %400 = vmatprep.subr.bf16.mxu0 0
    %401 = vmatpush1.bf16.xpose.msra.mxu0 0
    %402 = vmatprep.subr.bf16.mxu0 0
    %403 = vmatpush1.bf16.xpose.msra.mxu0 0
    %404 = vmatprep.subr.bf16.mxu0 0
    %405 = vmatpush1.bf16.xpose.msra.mxu0 0
    %406 = vmatprep.subr.bf16.mxu0 0
    %407 = vmatpush1.bf16.xpose.msra.mxu0 0
    %408 = vmatprep.subr.bf16.mxu0 0
    %409 = vmatpush1.bf16.xpose.msra.mxu0 0
    %410 = vmatprep.subr.bf16.mxu0 0
    %411 = vmatpush1.bf16.xpose.msra.mxu0 0
    %412 = vmatprep.mubr.bf16.mxu0 0
    %413 = vmatmul.mubr.bf16.gmra.mrb[0].mxu0 %v374
    %v414 = vpop.f32.mrb[0].mxu0
    %v415 = vadd.f32 0.0, %v414
    %v416 = vpop.f32.mrb[0].mxu0
    %v417 = vpop.f32.mrb[0].mxu0
    %v418 = vadd.f32 0.0, %v417
    %v419 = vpop.f32.mrb[0].mxu0
    %420 = vdwg.mxu0
    %421 = vmatprep.subr.bf16.mxu0 0
    %422 = vmatpush1.bf16.xpose.msra.mxu0 %v377
    %423 = vmatprep.subr.bf16.mxu0 0
    %424 = vmatpush1.bf16.xpose.msra.mxu0 0
    %425 = vmatprep.subr.bf16.mxu0 0
    %426 = vmatpush1.bf16.xpose.msra.mxu0 0
    %427 = vmatprep.subr.bf16.mxu0 0
    %428 = vmatpush1.bf16.xpose.msra.mxu0 0
    %429 = vmatprep.subr.bf16.mxu0 0
    %430 = vmatpush1.bf16.xpose.msra.mxu0 0
    %431 = vmatprep.subr.bf16.mxu0 0
    %432 = vmatpush1.bf16.xpose.msra.mxu0 0
    %433 = vmatprep.subr.bf16.mxu0 0
    %434 = vmatpush1.bf16.xpose.msra.mxu0 0
    %435 = vmatprep.subr.bf16.mxu0 0
    %436 = vmatpush1.bf16.xpose.msra.mxu0 0
    %437 = vmatprep.subr.bf16.mxu0 0
    %438 = vmatpush1.bf16.xpose.msra.mxu0 0
    %439 = vmatprep.subr.bf16.mxu0 0
    %440 = vmatpush1.bf16.xpose.msra.mxu0 0
    %441 = vmatprep.subr.bf16.mxu0 0
    %442 = vmatpush1.bf16.xpose.msra.mxu0 0
    %443 = vmatprep.subr.bf16.mxu0 0
    %444 = vmatpush1.bf16.xpose.msra.mxu0 0
    %445 = vmatprep.subr.bf16.mxu0 0
    %446 = vmatpush1.bf16.xpose.msra.mxu0 0
    %447 = vmatprep.subr.bf16.mxu0 0
    %448 = vmatpush1.bf16.xpose.msra.mxu0 0
    %449 = vmatprep.subr.bf16.mxu0 0
    %450 = vmatpush1.bf16.xpose.msra.mxu0 0
    %451 = vmatprep.subr.bf16.mxu0 0
    %452 = vmatpush1.bf16.xpose.msra.mxu0 0
    %453 = vmatprep.mubr.bf16.mxu0 0
    %454 = vmatmul.mubr.bf16.gmra.mrb[0].mxu0 %v375
    %v455 = vpop.f32.mrb[0].mxu0
    %v456 = vadd.f32 0.0, %v455
    %v457 = vpop.f32.mrb[0].mxu0
    %v458 = vpop.f32.mrb[0].mxu0
    %v459 = vadd.f32 0.0, %v458
    %v460 = vpop.f32.mrb[0].mxu0
    %461 = vdwg.mxu0
    %v462 = vmul.f32 %v415, 0.10206208
    %v463 = vmul.f32 %v418, 0.10206208
    %v464 = vmul.f32 %v456, 0.10206208
    %v465 = vmul.f32 %v459, 0.10206208
    %vm466 = vcmask 130048
    %v467 = vsel %vm466, %v462, -inf
    %468 = vmax.xlane.f32.xlu0 %v467
    %v469 = vpop.xlane.xlu0 %468
    %v470 = vsel %vm466, %v463, -inf
    %471 = vmax.xlane.f32.xlu0 %v470
    %v472 = vpop.xlane.xlu0 %471
    %v473 = vsel %vm466, %v464, -inf
    %474 = vmax.xlane.f32.xlu0 %v473
    %v475 = vpop.xlane.xlu0 %474
    %v476 = vsel %vm466, %v465, -inf
    %477 = vmax.xlane.f32.xlu0 %v476
    %v478 = vpop.xlane.xlu0 %477
    %v479 = vsub.f32 %v462, %v469
    %v480 = vsub.f32 %v463, %v472
    %v481 = vsub.f32 %v464, %v475
    %v482 = vsub.f32 %v465, %v478
    %v483 = vmul.f32 %v479, 1.442695
    %v484 = vpow.pop %v483
    %v485 = vmul.f32 %v480, 1.442695
    %v486 = vpow.pop %v485
    %v487 = vmul.f32 %v481, 1.442695
    %v488 = vpow.pop %v487
    %v489 = vmul.f32 %v482, 1.442695
    %v490 = vpow.pop %v489
    %v491 = vsel %vm466, %v484, 0.0
    %492 = vadd.xlane.f32.xlu0 %v491
    %v493 = vpop.xlane.xlu0 %492
    %v494 = vsel %vm466, %v486, 0.0
    %495 = vadd.xlane.f32.xlu0 %v494
    %v496 = vpop.xlane.xlu0 %495
    %v497 = vsel %vm466, %v488, 0.0
    %498 = vadd.xlane.f32.xlu0 %v497
    %v499 = vpop.xlane.xlu0 %498
    %v500 = vsel %vm466, %v490, 0.0
    %501 = vadd.xlane.f32.xlu0 %v500
    %v502 = vpop.xlane.xlu0 %501
    %v503 = vrcp.pop %v493
    %v504 = vrcp.pop %v496
    %v505 = vrcp.pop %v499
    %v506 = vrcp.pop %v502
    %v507 = vmul.f32 %v484, %v503
    %v508 = vmul.f32 %v486, %v504
    %v509 = vmul.f32 %v488, %v505
    %v510 = vmul.f32 %v490, %v506
    %v511 = vpack.c.bf16 %v508, %v507
    %v512 = vpack.c.bf16 %v510, %v509
    %v514 = vsel %vm466, %v511, 0
    %516 = vmatprep.subr.bf16.mxu0 0
    %517 = vmatpush1.bf16.msra.mxu0 %v378
    %518 = vmatprep.subr.bf16.mxu0 0
    %519 = vmatpush1.bf16.msra.mxu0 0
    %520 = vmatprep.subr.bf16.mxu0 0
    %521 = vmatpush1.bf16.msra.mxu0 0
    %522 = vmatprep.subr.bf16.mxu0 0
    %523 = vmatpush1.bf16.msra.mxu0 0
    %524 = vmatprep.subr.bf16.mxu0 0
    %525 = vmatpush1.bf16.msra.mxu0 0
    %526 = vmatprep.subr.bf16.mxu0 0
    %527 = vmatpush1.bf16.msra.mxu0 0
    %528 = vmatprep.subr.bf16.mxu0 0
    %529 = vmatpush1.bf16.msra.mxu0 0
    %530 = vmatprep.subr.bf16.mxu0 0
    %531 = vmatpush1.bf16.msra.mxu0 0
    %532 = vmatprep.subr.bf16.mxu0 0
    %533 = vmatpush1.bf16.msra.mxu0 0
    %534 = vmatprep.subr.bf16.mxu0 0
    %535 = vmatpush1.bf16.msra.mxu0 0
    %536 = vmatprep.subr.bf16.mxu0 0
    %537 = vmatpush1.bf16.msra.mxu0 0
    %538 = vmatprep.subr.bf16.mxu0 0
    %539 = vmatpush1.bf16.msra.mxu0 0
    %540 = vmatprep.subr.bf16.mxu0 0
    %541 = vmatpush1.bf16.msra.mxu0 0
    %542 = vmatprep.subr.bf16.mxu0 0
    %543 = vmatpush1.bf16.msra.mxu0 0
    %544 = vmatprep.subr.bf16.mxu0 0
    %545 = vmatpush1.bf16.msra.mxu0 0
    %546 = vmatprep.subr.bf16.mxu0 0
    %547 = vmatpush1.bf16.msra.mxu0 0
    %548 = vmatprep.mubr.bf16.mxu0 0
    %549 = vmatmul.mubr.bf16.gmra.mrb[0].mxu0 %v514
    %v550 = vpop.f32.mrb[0].mxu0
    %v551 = vadd.f32 0.0, %v550
    %v552 = vpop.f32.mrb[0].mxu0
    %v553 = vpop.f32.mrb[0].mxu0
    %v554 = vadd.f32 0.0, %v553
    %v555 = vpop.f32.mrb[0].mxu0
    %556 = vdwg.mxu0
    %v558 = vsel %vm466, %v512, 0
    %560 = vmatprep.subr.bf16.mxu0 0
    %561 = vmatpush1.bf16.msra.mxu0 %v379
    %562 = vmatprep.subr.bf16.mxu0 0
    %563 = vmatpush1.bf16.msra.mxu0 0
    %564 = vmatprep.subr.bf16.mxu0 0
    %565 = vmatpush1.bf16.msra.mxu0 0
    %566 = vmatprep.subr.bf16.mxu0 0
    %567 = vmatpush1.bf16.msra.mxu0 0
    %568 = vmatprep.subr.bf16.mxu0 0
    %569 = vmatpush1.bf16.msra.mxu0 0
    %570 = vmatprep.subr.bf16.mxu0 0
    %571 = vmatpush1.bf16.msra.mxu0 0
    %572 = vmatprep.subr.bf16.mxu0 0
    %573 = vmatpush1.bf16.msra.mxu0 0
    %574 = vmatprep.subr.bf16.mxu0 0
    %575 = vmatpush1.bf16.msra.mxu0 0
    %576 = vmatprep.subr.bf16.mxu0 0
    %577 = vmatpush1.bf16.msra.mxu0 0
    %578 = vmatprep.subr.bf16.mxu0 0
    %579 = vmatpush1.bf16.msra.mxu0 0
    %580 = vmatprep.subr.bf16.mxu0 0
    %581 = vmatpush1.bf16.msra.mxu0 0
    %582 = vmatprep.subr.bf16.mxu0 0
    %583 = vmatpush1.bf16.msra.mxu0 0
    %584 = vmatprep.subr.bf16.mxu0 0
    %585 = vmatpush1.bf16.msra.mxu0 0
    %586 = vmatprep.subr.bf16.mxu0 0
    %587 = vmatpush1.bf16.msra.mxu0 0
    %588 = vmatprep.subr.bf16.mxu0 0
    %589 = vmatpush1.bf16.msra.mxu0 0
    %590 = vmatprep.subr.bf16.mxu0 0
    %591 = vmatpush1.bf16.msra.mxu0 0
    %592 = vmatprep.mubr.bf16.mxu0 0
    %593 = vmatmul.mubr.bf16.gmra.mrb[0].mxu0 %v558
    %v594 = vpop.f32.mrb[0].mxu0
    %v595 = vadd.f32 0.0, %v594
    %v596 = vpop.f32.mrb[0].mxu0
    %v597 = vpop.f32.mrb[0].mxu0
    %v598 = vadd.f32 0.0, %v597
    %v599 = vpop.f32.mrb[0].mxu0
    %600 = vdwg.mxu0
    %v601 = vpack.c.bf16 %v554, %v551
    %v602 = vpack.c.bf16 %v598, %v595
    %v603 = vld [vmem:[#allocation8] sm:$0xf]
    %v604 = vld [vmem:[#allocation8 + $0x4] sm:$0xf]
    %v605 = vld [vmem:[#allocation8 + $0x8] sm:$0xf]
    %v606 = vld [vmem:[#allocation8 + $0xc] sm:$0xf]
    %v607 = vld [vmem:[#allocation8 + $0x10] sm:$0xf]
    %v608 = vld [vmem:[#allocation8 + $0x14] sm:$0xf]
    %v609 = vld [vmem:[#allocation8 + $0x18] sm:$0xf]
    %v610 = vld [vmem:[#allocation8 + $0x1c] sm:$0xf]
    %v611 = vld [vmem:[#allocation8 + $0x20] sm:$0xf]
    %v612 = vld [vmem:[#allocation8 + $0x24] sm:$0xf]
    %v613 = vld [vmem:[#allocation8 + $0x28] sm:$0xf]
    %v614 = vld [vmem:[#allocation8 + $0x2c] sm:$0xf]
    %v615 = vld [vmem:[#allocation8 + $0x30] sm:$0xf]
    %v616 = vld [vmem:[#allocation8 + $0x34] sm:$0xf]
    %v617 = vld [vmem:[#allocation8 + $0x38] sm:$0xf]
    %v618 = vld [vmem:[#allocation8 + $0x3c] sm:$0xf]
    %v619 = vld [vmem:[%s4] sm:$0x1]
    %v621 = vlaneseq
    %v622 = vshrl.u32 %v621, 7
    %v623 = vsub.s32 0, %v622
    %v624 = vrot.slane %v619, %v623
    %v642 = vunpack.c.l.b16 %v603
    %v643 = vunpack.c.l.b16 %v604
    %v644 = vunpack.c.l.b16 %v605
    %v645 = vunpack.c.l.b16 %v606
    %v646 = vunpack.c.l.b16 %v607
    %v647 = vunpack.c.l.b16 %v608
    %v648 = vunpack.c.l.b16 %v609
    %v649 = vunpack.c.l.b16 %v610
    %v650 = vunpack.c.l.b16 %v611
    %v651 = vunpack.c.l.b16 %v612
    %v652 = vunpack.c.l.b16 %v613
    %v653 = vunpack.c.l.b16 %v614
    %v654 = vunpack.c.l.b16 %v615
    %v655 = vunpack.c.l.b16 %v616
    %v656 = vunpack.c.l.b16 %v617
    %v657 = vunpack.c.l.b16 %v618
    %v658 = vpack.c.b16 %v643, %v642
    %v659 = vpack.c.b16 %v645, %v644
    %v660 = vpack.c.b16 %v647, %v646
    %v661 = vpack.c.b16 %v649, %v648
    %v662 = vpack.c.b16 %v651, %v650
    %v663 = vpack.c.b16 %v653, %v652
    %v664 = vpack.c.b16 %v655, %v654
    %v665 = vpack.c.b16 %v657, %v656
    %674 = vmatprep.subr.bf16.mxu0 0
    %675 = vmatpush1.bf16.msra.mxu0 %v658
    %676 = vmatprep.subr.bf16.mxu0 0
    %677 = vmatpush1.bf16.msra.mxu0 %v659
    %678 = vmatprep.subr.bf16.mxu0 0
    %679 = vmatpush1.bf16.msra.mxu0 %v660
    %680 = vmatprep.subr.bf16.mxu0 0
    %681 = vmatpush1.bf16.msra.mxu0 %v661
    %682 = vmatprep.subr.bf16.mxu0 0
    %683 = vmatpush1.bf16.msra.mxu0 %v662
    %684 = vmatprep.subr.bf16.mxu0 0
    %685 = vmatpush1.bf16.msra.mxu0 %v663
    %686 = vmatprep.subr.bf16.mxu0 0
    %687 = vmatpush1.bf16.msra.mxu0 %v664
    %688 = vmatprep.subr.bf16.mxu0 0
    %689 = vmatpush1.bf16.msra.mxu0 %v665
    %690 = vmatprep.subr.bf16.mxu0 0
    %691 = vmatpush1.bf16.msra.mxu0 0
    %692 = vmatprep.subr.bf16.mxu0 0
    %693 = vmatpush1.bf16.msra.mxu0 0
    %694 = vmatprep.subr.bf16.mxu0 0
    %695 = vmatpush1.bf16.msra.mxu0 0
    %696 = vmatprep.subr.bf16.mxu0 0
    %697 = vmatpush1.bf16.msra.mxu0 0
    %698 = vmatprep.subr.bf16.mxu0 0
    %699 = vmatpush1.bf16.msra.mxu0 0
    %700 = vmatprep.subr.bf16.mxu0 0
    %701 = vmatpush1.bf16.msra.mxu0 0
    %702 = vmatprep.subr.bf16.mxu0 0
    %703 = vmatpush1.bf16.msra.mxu0 0
    %704 = vmatprep.subr.bf16.mxu0 0
    %705 = vmatpush1.bf16.msra.mxu0 0
    %706 = vmatprep.mubr.bf16.mxu0 0
    %707 = vmatmul.mubr.bf16.gmra.mrb[0].mxu0 %v601
    %v708 = vpop.f32.mrb[0].mxu0
    %v709 = vadd.f32 %v624, %v708
    %v710 = vpop.f32.mrb[0].mxu0
    %v711 = vpop.f32.mrb[0].mxu0
    %v712 = vadd.f32 %v624, %v711
    %v713 = vpop.f32.mrb[0].mxu0
    %714 = vmatprep.mubr.bf16.mxu0 0
    %715 = vmatmul.mubr.bf16.gmra.mrb[0].mxu0 %v602
    %v716 = vpop.f32.mrb[0].mxu0
    %v717 = vadd.f32 %v624, %v716
    %v718 = vpop.f32.mrb[0].mxu0
    %v719 = vpop.f32.mrb[0].mxu0
    %v720 = vadd.f32 %v624, %v719
    %v721 = vpop.f32.mrb[0].mxu0
    %722 = vdwg.mxu0
    %723 = vst [vmem:[#allocation9] sm:$0xff] %v709
    %724 = vst [vmem:[#allocation9 + $0x8] sm:$0xff] %v712
    %725 = vst [vmem:[#allocation9 + $0x10] sm:$0xff] %v717
    %726 = vst [vmem:[#allocation9 + $0x18] sm:$0xff] %v720
    // Predicated region
    $region38: #{tpu_custom_call.1} parent=1 // pred_check
      _
    $region39: #{tpu_custom_call.1} parent=1 // pred_check_branch
      %728 = sbr.rel (0) target = $region41
    $region40: #{tpu_custom_call.1} parent=1 // pred_region
      %s730 = ssub.s32 512, 512
      %731 = vsyncadd [#allocation5], %s730
      %s732 = sshll.u32 [#allocation9], 4
      %s733 = int_to_ptr.vmem [resolvable:$true] %s732
      %738 = dma.vmem_to_hbm [thread:$0]  %s733, 512, %s5, [#allocation5], 128, 128, 8
    $region41: #{tpu_custom_call.1} parent=1 // pred_fallthru
      _
    // Predicated region
    $region42: #{tpu_custom_call.1} parent=1 // pred_check
      _
    $region43: #{tpu_custom_call.1} parent=1 // pred_check_branch
      %740 = sbr.rel (0) target = $region45
    $region44: #{tpu_custom_call.1} parent=1 // pred_region
      %741 = dma.done [#allocation5], 512
    $region45: #{tpu_custom_call.1} parent=1 // pred_fallthru
      _
    %742 = vsyncpa [#allocation4], 1
    %743 = vsyncpa [#allocation7], 1
    %744 = vsyncpa [#allocation5], 1

</llo_original>
